<compile_context>
chip_gen: v6e
topology: v6e:2x2x1
jax: 0.10.0
libtpu: 0.0.40
codegen_flags: <defaults>
</compile_context>

<pallas_src>
import functools
import inspect

import jax
import jax.numpy as jnp
from jax.experimental import pallas as pl
from jax.experimental.pallas import tpu as pltpu

_MiB = 1024 * 1024


# ----------------------------------------------------------------------------- #
# Kernels
# ----------------------------------------------------------------------------- #
def ffn_kernel_resident(x_ref, w1_ref, b1_ref, w2_ref, b2_ref, o_ref):
    """Whole FFN for one M-tile; W1/W2 fully resident in VMEM (1-D grid over M)."""
    h = jnp.dot(x_ref[...], w1_ref[...], preferred_element_type=jnp.float32)
    h = jnp.maximum(h + b1_ref[...], 0.0)                       # f32 bias + ReLU (VPU)
    y = jnp.dot(h.astype(w2_ref.dtype), w2_ref[...],
                preferred_element_type=jnp.float32)
    o_ref[...] = (y + b2_ref[...]).astype(o_ref.dtype)


def ffn_kernel_streamed(x_ref, w1_ref, b1_ref, w2_ref, b2_ref, o_ref, acc_ref):
    """d_ff chunked along the innermost ("arbitrary") grid axis.
    Exact because ReLU is elementwise per d_ff column:
        y = sum_c relu(x @ W1[:, c] + b1[c]) @ W2[c, :]
    """
    f = pl.program_id(1)

    @pl.when(f == 0)
    def _init():
        acc_ref[...] = jnp.zeros_like(acc_ref)

    h = jnp.dot(x_ref[...], w1_ref[...], preferred_element_type=jnp.float32)
    h = jnp.maximum(h + b1_ref[...], 0.0)
    acc_ref[...] += jnp.dot(h.astype(w2_ref.dtype), w2_ref[...],
                            preferred_element_type=jnp.float32)

    @pl.when(f == pl.num_programs(1) - 1)
    def _finalize():
        o_ref[...] = (acc_ref[...] + b2_ref[...]).astype(o_ref.dtype)


# ----------------------------------------------------------------------------- #
# Helpers
# ----------------------------------------------------------------------------- #
def _cdiv(a, b):
    return -(-a // b)


def _round_up(x, m):
    return _cdiv(x, m) * m


def _pad2d(a, rows, cols):
    pr, pc = rows - a.shape[0], cols - a.shape[1]
    if pr == 0 and pc == 0:
        return a
    return jnp.pad(a, ((0, pr), (0, pc)))


@functools.lru_cache(maxsize=1)
def _tpu_hw_info():
    """Best-effort (vmem_bytes_per_tensorcore, tensorcores_per_chip)."""
    kind = ""
    try:
        kind = (jax.devices()[0].device_kind or "").lower()
    except Exception:
        pass
    is_v7 = ("v7" in kind) or ("7x" in kind) or ("tpu7" in kind)

    vmem = None
    try:
        info = pltpu.get_tpu_info()
        v = int(getattr(info, "vmem_capacity_bytes", 0) or 0)
        if v > 0:
            vmem = v
    except Exception:
        vmem = None
    if vmem is None:
        if is_v7:
            vmem = 64 * _MiB                      # v7x: 64 MiB per TensorCore
        elif ("v5" in kind) or ("v6" in kind):
            vmem = 128 * _MiB                     # v5e / v6e: 128 MiB
        else:
            vmem = 64 * _MiB                      # unknown generation: be safe
    return vmem, (2 if is_v7 else 1)


@functools.lru_cache(maxsize=1)
def _supports_pipeline_mode():
    """Feature-detect BlockSpec(pipeline_mode=pl.Buffered(1)) single-buffering."""
    try:
        if not hasattr(pl, "Buffered"):
            return False
        if "pipeline_mode" not in inspect.signature(pl.BlockSpec).parameters:
            return False
        pl.BlockSpec((8, 128), lambda i: (0, 0), pipeline_mode=pl.Buffered(1))
        return True
    except Exception:
        return False


# ----------------------------------------------------------------------------- #
# Wrapper
# ----------------------------------------------------------------------------- #
def feed_forward_network(x, w1, b1, w2, b2, *, tm_cap=512, compute_dtype=None,
                         vmem_budget_bytes=None):
    """x: [batch, seq, d_model]; W1: [d_model, d_ff]; b1: [d_ff];
    W2: [d_ff, d_model]; b2: [d_model].  Equivalent to the PyTorch module's
    linear2(relu(linear1(x))) (weights stored pre-transposed)."""
    batch, seq, d_model = x.shape
    d_ff = w1.shape[1]
    assert w1.shape == (d_model, d_ff) and w2.shape == (d_ff, d_model)
    assert b1.shape == (d_ff,) and b2.shape == (d_model,)

    out_dtype = x.dtype
    if compute_dtype is not None:
        # bf16 recommended for v5e/v6e/v7x MXU peak; biases & accumulation stay f32.
        x = x.astype(compute_dtype)
        w1 = w1.astype(compute_dtype)
        w2 = w2.astype(compute_dtype)
    b1 = b1.astype(jnp.float32)
    b2 = b2.astype(jnp.float32)

    io_isz = jnp.dtype(x.dtype).itemsize
    w_isz = jnp.dtype(w1.dtype).itemsize
    out_isz = jnp.dtype(out_dtype).itemsize

    # ---------------- hardware-aware VMEM budget --------------------------------
    vmem_cap, n_tc = _tpu_hw_info()
    has_pm = _supports_pipeline_mode()
    # Headroom for Mosaic-internal scratch / semaphores / descriptors:
    #   v7x (64 MiB/core) -> ~52 MiB cap;  v5e/v6e (128 MiB) -> ~115 MiB cap.
    vmem_limit_cap = max(16 * _MiB, int(min(vmem_cap - 12 * _MiB, 0.9 * vmem_cap)))
    budget = (int(vmem_budget_bytes) if vmem_budget_bytes is not None
              else int(0.8 * vmem_limit_cap))

    # ---------------- tiling policy ----------------------------------------------
    M = batch * seq
    d_model_p = _round_up(d_model, 128)          # lane-dense feature dims
    d_ff_128 = _round_up(d_ff, 128)

    # Row-tile granularity: sublane packing is 8 (f32) / 16 (bf16) / 32 (8-bit).
    granule = max(8, 32 // io_isz)
    Mg = _round_up(M, granule)

    def footprint(tm, tf, resident):
        wbuf = 1 if (resident and has_pm) else 2              # invariant weights 1-buffered
        weights = wbuf * tf * (2 * d_model_p * w_isz + 4)     # W1 chunk + W2 chunk + b1
        io = 2 * tm * d_model_p * (io_isz + out_isz)          # double-buffered x / out tiles
        acc = 0 if resident else tm * d_model_p * 4           # f32 accumulator scratch
        h = tm * tf * (4 + w_isz)                             # f32 intermediate + cast copy
        misc = (1 if has_pm else 2) * d_model_p * 4 + (256 << 10)
        return weights + io + acc + h + misc

    def largest_tm(tf, resident):
        tm = _round_up(min(tm_cap, Mg), granule)
        while tm > granule and footprint(tm, tf, resident) > budget:
            tm -= granule
        return max(tm, granule)

    # 1) Prefer fully-resident weights (fetched from HBM exactly once), unless that
    #    forces a degenerate row tile (bad MXU feed / per-step overhead).
    tm = largest_tm(d_ff_128, resident=True)
    weights_resident = (footprint(tm, d_ff_128, True) <= budget
                        and tm >= min(Mg, 128))
    if weights_resident:
        tf, n_chunks, d_ff_p = d_ff_128, 1, d_ff_128
    else:
        # 2) Streaming: weight HBM traffic ~ 1/tm, so maximize tm first, then grow
        #    the d_ff chunk to fill leftover VMEM, then round the chunk so d_ff
        #    padding is minimal.
        tm = largest_tm(128, resident=False)
        tf = 128
        while tf + 128 <= d_ff_128 and footprint(tm, tf + 128, False) <= budget:
            tf += 128
        n_chunks = _cdiv(d_ff_128, tf)
        tf = _round_up(_cdiv(d_ff_128, n_chunks), 128)
        d_ff_p = n_chunks * tf

    # On multi-TensorCore chips (v7x) give the parallel M axis an even, >=2 tile
    # count so both cores get balanced work.  Never shrink tm on 1-TC chips.
    if n_tc >= 2 and M > granule:
        n_m = _cdiv(M, tm)
        if n_m < 2 or n_m % 2 == 1:
            target = max(2, n_m + (n_m % 2))
            cand = max(granule, _round_up(_cdiv(M, target), granule))
            if _cdiv(M, cand) % 2 == 0:
                tm = cand

    n_m = _cdiv(M, tm)
    grid = (n_m,) if n_chunks == 1 else (n_m, n_chunks)

    # ---- pad operands: zero padding on feature axes contributes exactly zero.
    #      M is NOT padded (partial last row-tile is masked by Pallas).  For
    #      128-aligned d_model / d_ff these pads are no-ops; in a real model the
    #      padded params should be prepared once outside the step function.
    x2d = _pad2d(x.reshape(M, d_model), M, d_model_p)
    w1p = _pad2d(w1, d_model_p, d_ff_p)
    w2p = _pad2d(w2, d_ff_p, d_model_p)
    b1p = _pad2d(b1.reshape(1, d_ff), 1, d_ff_p)
    b2p = _pad2d(b2.reshape(1, d_model), 1, d_model_p)

    # ---- cost estimate (includes per-M-tile weight re-streaming when chunked) ----
    w_hbm_bytes = d_model_p * d_ff_p * w_isz * 2 + d_ff_p * 4 + d_model_p * 4
    w_reads = 1 if n_chunks == 1 else n_m
    cost = pl.CostEstimate(
        flops=4 * M * d_model * d_ff, transcendentals=0,
        bytes_accessed=M * d_model_p * (io_isz + out_isz) + w_reads * w_hbm_bytes)

    fp = footprint(tm, tf, weights_resident)
    extra = tf * (2 * d_model_p * w_isz + 4) if (weights_resident and has_pm) else 0
    vmem_limit = int(min(vmem_limit_cap,
                         max(32 * _MiB, int(1.25 * fp) + extra + 4 * _MiB)))

    # ---- build & run --------------------------------------------------------------
    def build(use_buffered):
        def spec(shape, index_map, invariant):
            if invariant and use_buffered:
                return pl.BlockSpec(shape, index_map, pipeline_mode=pl.Buffered(1))
            return pl.BlockSpec(shape, index_map)

        if n_chunks == 1:
            in_specs = [
                spec((tm, d_model_p), lambda i: (i, 0), False),       # x tile
                spec((d_model_p, tf), lambda i: (0, 0), True),        # W1 (resident)
                spec((1, tf), lambda i: (0, 0), True),                # b1
                spec((tf, d_model_p), lambda i: (0, 0), True),        # W2 (resident)
                spec((1, d_model_p), lambda i: (0, 0), True),         # b2
            ]
            out_spec = pl.BlockSpec((tm, d_model_p), lambda i: (i, 0))
            kernel, scratch, dims = ffn_kernel_resident, (), ("parallel",)
        else:
            in_specs = [
                spec((tm, d_model_p), lambda i, f: (i, 0), False),    # x tile
                spec((d_model_p, tf), lambda i, f: (0, f), False),    # W1 d_ff-chunk
                spec((1, tf), lambda i, f: (0, f), False),            # b1 chunk
                spec((tf, d_model_p), lambda i, f: (f, 0), False),    # W2 d_ff-chunk
                spec((1, d_model_p), lambda i, f: (0, 0), True),      # b2 (invariant)
            ]
            out_spec = pl.BlockSpec((tm, d_model_p), lambda i, f: (i, 0))
            kernel = ffn_kernel_streamed
            scratch = (pltpu.VMEM((tm, d_model_p), jnp.float32),)
            dims = ("parallel", "arbitrary")

        return pl.pallas_call(
            kernel,
            out_shape=jax.ShapeDtypeStruct((M, d_model_p), out_dtype),
            grid_spec=pltpu.PrefetchScalarGridSpec(
                num_scalar_prefetch=0,
                grid=grid,
                in_specs=in_specs,
                out_specs=out_spec,
                scratch_shapes=scratch),
            compiler_params=pltpu.CompilerParams(
                dimension_semantics=dims,
                vmem_limit_bytes=vmem_limit),
            cost_estimate=cost,
        )(x2d, w1p, b1p, w2p, b2p)

    if has_pm:
        try:
            out2d = build(use_buffered=True)
        except (TypeError, ValueError, NotImplementedError, pltpu.LoweringException):
            # pl.Buffered(1) rejected at lowering on this build: retry with default
            # double-buffered specs (identical semantics).
            out2d = build(use_buffered=False)
    else:
        out2d = build(use_buffered=False)

    if d_model_p != d_model:
        out2d = out2d[:, :d_model]
    return out2d.reshape(batch, seq, d_model).astype(out_dtype)


def init_params(key, d_model, d_ff, dtype=jnp.float32):
    """Matches nn.Linear's U(-1/sqrt(fan_in), 1/sqrt(fan_in)) init.
    Weights stored pre-transposed: W1: [d_model, d_ff], W2: [d_ff, d_model]."""
    k1, k2, k3, k4 = jax.random.split(key, 4)
    bound1 = 1.0 / (d_model ** 0.5)
    bound2 = 1.0 / (d_ff ** 0.5)
    w1 = jax.random.uniform(k1, (d_model, d_ff), dtype, -bound1, bound1)
    b1 = jax.random.uniform(k2, (d_ff,), dtype, -bound1, bound1)
    w2 = jax.random.uniform(k3, (d_ff, d_model), dtype, -bound2, bound2)
    b2 = jax.random.uniform(k4, (d_model,), dtype, -bound2, bound2)
    return w1, b1, w2, b2


if __name__ == "__main__":
    d_model, d_ff = 32, 64
    batch, seq = 2, 8

    key = jax.random.PRNGKey(0)
    kx, kp = jax.random.split(key)
    x = jax.random.normal(kx, (batch, seq, d_model), dtype=jnp.float32)
    w1, b1, w2, b2 = init_params(kp, d_model, d_ff)

    ref = jnp.maximum(x @ w1 + b1, 0.0) @ w2 + b2

    # 1) f32, weights fully resident (1-D grid, no accumulator scratch).
    out = jax.block_until_ready(feed_forward_network(x, w1, b1, w2, b2))
    assert out.shape == (batch, seq, d_model)
    assert jnp.allclose(out, ref, atol=1e-5, rtol=1e-5)

    # 2) Exercise the d_ff-streaming (accumulator) path deterministically by using a
    #    larger d_ff and a tiny artificial VMEM budget.
    d_ff2 = 512
    w1b, b1b, w2b, b2b = init_params(jax.random.PRNGKey(1), d_model, d_ff2)
    ref2 = jnp.maximum(x @ w1b + b1b, 0.0) @ w2b + b2b
    out2 = jax.block_until_ready(
        feed_forward_network(x, w1b, b1b, w2b, b2b, vmem_budget_bytes=512 * 1024))
    assert out2.shape == (batch, seq, d_model)
    assert jnp.allclose(out2, ref2, atol=1e-4, rtol=1e-4)

    # 3) bf16 compute path (MXU-peak dtype on v5e/v6e/v7x); looser tolerance.
    out_bf16 = jax.block_until_ready(
        feed_forward_network(x, w1, b1, w2, b2, compute_dtype=jnp.bfloat16))
    assert out_bf16.shape == (batch, seq, d_model)
    assert jnp.allclose(out_bf16, ref, atol=1e-1, rtol=5e-2)

    print("KERNEL_OK")
</pallas_src>

<mosaic_0001>
module attributes {stable_mosaic.version = 11 : i64} {
  func.func @ffn_kernel_resident(%arg0: i32, %arg1: memref<16x128xf32, #tpu.memory_space<vmem>>, %arg2: memref<128x128xf32, #tpu.memory_space<vmem>>, %arg3: memref<1x128xf32, #tpu.memory_space<vmem>>, %arg4: memref<128x128xf32, #tpu.memory_space<vmem>>, %arg5: memref<1x128xf32, #tpu.memory_space<vmem>>, %arg6: memref<16x128xf32, #tpu.memory_space<vmem>>) attributes {dimension_semantics = [#tpu.dimension_semantics<parallel>], iteration_bounds = array<i64: 1>, scalar_prefetch = 0 : i64, scratch_operands = 0 : i64, tpu.core_type = #tpu.core_type<tc>, window_params = [{transform_indices = @transform_0, window_bounds = array<i64: 16, 128>}, {pipeline_mode = #tpu.pipeline_mode<synchronous>, transform_indices = @transform_1, window_bounds = array<i64: 128, 128>}, {pipeline_mode = #tpu.pipeline_mode<synchronous>, transform_indices = @transform_2, window_bounds = array<i64: 1, 128>}, {pipeline_mode = #tpu.pipeline_mode<synchronous>, transform_indices = @transform_3, window_bounds = array<i64: 128, 128>}, {pipeline_mode = #tpu.pipeline_mode<synchronous>, transform_indices = @transform_4, window_bounds = array<i64: 1, 128>}, {transform_indices = @transform_5, window_bounds = array<i64: 16, 128>}]} {
    %c0 = arith.constant 0 : index
    %c0_0 = arith.constant 0 : index
    %0 = vector.load %arg1[%c0, %c0_0] : memref<16x128xf32, #tpu.memory_space<vmem>>, vector<16x128xf32>
    %c0_1 = arith.constant 0 : index
    %c0_2 = arith.constant 0 : index
    %1 = vector.load %arg2[%c0_1, %c0_2] : memref<128x128xf32, #tpu.memory_space<vmem>>, vector<128x128xf32>
    %cst = arith.constant dense<0.000000e+00> : vector<16x128xf32>
    %2 = tpu.matmul %0, %1, %cst {dimension_numbers = #tpu.dot_dimension_numbers<[1], [0], [0], [1], [0, 0, 1, 1], [], []>} : vector<16x128xf32>, vector<128x128xf32>, vector<16x128xf32> -> vector<16x128xf32>
    %c0_3 = arith.constant 0 : index
    %c0_4 = arith.constant 0 : index
    %3 = vector.load %arg3[%c0_3, %c0_4] : memref<1x128xf32, #tpu.memory_space<vmem>>, vector<1x128xf32>
    %4 = vector.broadcast %3 : vector<1x128xf32> to vector<16x128xf32>
    %5 = arith.addf %2, %4 : vector<16x128xf32>
    %cst_5 = arith.constant 0.000000e+00 : f32
    %6 = vector.broadcast %cst_5 : f32 to vector<16x128xf32>
    %7 = arith.maximumf %5, %6 : vector<16x128xf32>
    %c0_6 = arith.constant 0 : index
    %c0_7 = arith.constant 0 : index
    %8 = vector.load %arg4[%c0_6, %c0_7] : memref<128x128xf32, #tpu.memory_space<vmem>>, vector<128x128xf32>
    %cst_8 = arith.constant dense<0.000000e+00> : vector<16x128xf32>
    %9 = tpu.matmul %7, %8, %cst_8 {dimension_numbers = #tpu.dot_dimension_numbers<[1], [0], [0], [1], [0, 0, 1, 1], [], []>} : vector<16x128xf32>, vector<128x128xf32>, vector<16x128xf32> -> vector<16x128xf32>
    %c0_9 = arith.constant 0 : index
    %c0_10 = arith.constant 0 : index
    %10 = vector.load %arg5[%c0_9, %c0_10] : memref<1x128xf32, #tpu.memory_space<vmem>>, vector<1x128xf32>
    %11 = vector.broadcast %10 : vector<1x128xf32> to vector<16x128xf32>
    %12 = arith.addf %9, %11 : vector<16x128xf32>
    %c0_11 = arith.constant 0 : index
    %c0_12 = arith.constant 0 : index
    %13 = vector.load %arg6[%c0_11, %c0_12] : memref<16x128xf32, #tpu.memory_space<vmem>>, vector<16x128xf32>
    tpu.vector_store %arg6[%c0_11, %c0_12], %12 {strides = array<i32>} : memref<16x128xf32, #tpu.memory_space<vmem>>, vector<16x128xf32>,
    return
  }
  func.func @transform_0(%arg0: i32) -> (i32, i32) {
    %c0_i32 = arith.constant 0 : i32
    %c0_i32_0 = arith.constant 0 : i32
    return %arg0, %c0_i32 : i32, i32
  }
  func.func @transform_1(%arg0: i32) -> (i32, i32) {
    %c0_i32 = arith.constant 0 : i32
    %c0_i32_0 = arith.constant 0 : i32
    %c0_i32_1 = arith.constant 0 : i32
    return %c0_i32, %c0_i32_0 : i32, i32
  }
  func.func @transform_2(%arg0: i32) -> (i32, i32) {
    %c0_i32 = arith.constant 0 : i32
    %c0_i32_0 = arith.constant 0 : i32
    %c0_i32_1 = arith.constant 0 : i32
    return %c0_i32, %c0_i32_0 : i32, i32
  }
  func.func @transform_3(%arg0: i32) -> (i32, i32) {
    %c0_i32 = arith.constant 0 : i32
    %c0_i32_0 = arith.constant 0 : i32
    %c0_i32_1 = arith.constant 0 : i32
    return %c0_i32, %c0_i32_0 : i32, i32
  }
  func.func @transform_4(%arg0: i32) -> (i32, i32) {
    %c0_i32 = arith.constant 0 : i32
    %c0_i32_0 = arith.constant 0 : i32
    %c0_i32_1 = arith.constant 0 : i32
    return %c0_i32, %c0_i32_0 : i32, i32
  }
  func.func @transform_5(%arg0: i32) -> (i32, i32) {
    %c0_i32 = arith.constant 0 : i32
    %c0_i32_0 = arith.constant 0 : i32
    return %arg0, %c0_i32 : i32, i32
  }
}

</mosaic_0001>

<llo_original>
// kernel: tpu_custom_call.1
$region0: #{tpu_custom_call.1}
  #allocation0 [shape = 'u32[]', space=smem, size = 0x4, offset = 0x4, fixed_abs, tag = 'smem constant byte address 0x4 - core index']
  #allocation1 [shape = 'u32[144,128]{1,0:T(1,128)}', space=vmem, size = 0x12000, scoped, tag = 'internal scratch']
  %s0 = inlined_call_operand.hbm [shape: f32[16,128], index: 0, kind: input, shape index: {}]
  %s1 = inlined_call_operand.hbm [shape: f32[128,128], index: 1, kind: input, shape index: {}]
  %s2 = inlined_call_operand.vmem [shape: f32[1,128], index: 2, kind: input, shape index: {}]
  %s3 = inlined_call_operand.hbm [shape: f32[128,128], index: 3, kind: input, shape index: {}]
  %s4 = inlined_call_operand.vmem [shape: f32[1,128], index: 4, kind: input, shape index: {}]
  %s5 = inlined_call_operand.hbm [shape: f32[16,128], index: 5, kind: output, shape index: {}]
  %s6 = sld [smem:[#allocation0]]
  $region42: #{tpu_custom_call.1} parent=0
    _
  %s8 = ssub.s32 1, %s6
  %s9 = scalar_select 0, %s8, %s6
  $region1: #{tpu_custom_call.1} parent=0
    #allocation2 [shape = 'u8[8192]{0}', space=vmem, size = 0x2000, scoped, tag = 'input window, operand 0, single buffered']
    #allocation3 [shape = 's32[1]{0}', space=sflag, size = 0x4, scoped, tag = 'scoped memory for tpu_custom_call.1']
    #allocation4 [shape = 's32[1]{0}', space=sflag, size = 0x4, scoped, tag = 'scoped memory for tpu_custom_call.1']
    #allocation5 [shape = 'u8[65536]{0}', space=vmem, size = 0x10000, scoped, tag = 'input window, operand 1, single buffered']
    #allocation6 [shape = 's32[1]{0}', space=sflag, size = 0x4, scoped, tag = 'scoped memory for tpu_custom_call.1']
    #allocation7 [shape = 'u8[65536]{0}', space=vmem, size = 0x10000, scoped, tag = 'input window, operand 3, single buffered']
    #allocation8 [shape = 'u8[8192]{0}', space=vmem, size = 0x2000, scoped, tag = 'output window, operand 0, single buffered']
    %10 = vsyncpa [#allocation3], 0
    %11 = vsyncpa [#allocation6], 0
    %12 = vsyncpa [#allocation4], 0
    // Predicated region
    $region2: #{tpu_custom_call.1} parent=1 // pred_check
      _
    $region3: #{tpu_custom_call.1} parent=1 // pred_check_branch
      %14 = sbr.rel (0) target = $region5
    $region4: #{tpu_custom_call.1} parent=1 // pred_region
      %s16 = ssub.s32 256, 256
      %17 = vsyncadd [#allocation3], %s16
      %s18 = sshll.u32 [#allocation2], 4
      %s19 = int_to_ptr.vmem [resolvable:$true] %s18
      %24 = dma.hbm_to_vmem [thread:$0]  %s0, 256, %s19, [#allocation3], 128, 128, 8
    $region5: #{tpu_custom_call.1} parent=1 // pred_fallthru
      _
    // Predicated region
    $region6: #{tpu_custom_call.1} parent=1 // pred_check
      _
    $region7: #{tpu_custom_call.1} parent=1 // pred_check_branch
      %26 = sbr.rel (0) target = $region9
    $region8: #{tpu_custom_call.1} parent=1 // pred_region
      %s28 = ssub.s32 2048, 2048
      %29 = vsyncadd [#allocation6], %s28
      %s30 = sshll.u32 [#allocation5], 4
      %s31 = int_to_ptr.vmem [resolvable:$true] %s30
      %36 = dma.hbm_to_vmem [thread:$0]  %s1, 2048, %s31, [#allocation6], 128, 128, 8
    $region9: #{tpu_custom_call.1} parent=1 // pred_fallthru
      _
    // Predicated region
    $region10: #{tpu_custom_call.1} parent=1 // pred_check
      _
    $region11: #{tpu_custom_call.1} parent=1 // pred_check_branch
      %38 = sbr.rel (0) target = $region13
    $region12: #{tpu_custom_call.1} parent=1 // pred_region
      _
    $region13: #{tpu_custom_call.1} parent=1 // pred_fallthru
      _
    // Predicated region
    $region14: #{tpu_custom_call.1} parent=1 // pred_check
      _
    $region15: #{tpu_custom_call.1} parent=1 // pred_check_branch
      %40 = sbr.rel (0) target = $region17
    $region16: #{tpu_custom_call.1} parent=1 // pred_region
      %s42 = ssub.s32 2048, 2048
      %43 = vsyncadd [#allocation6], %s42
      %s44 = sshll.u32 [#allocation7], 4
      %s45 = int_to_ptr.vmem [resolvable:$true] %s44
      %50 = dma.hbm_to_vmem [thread:$0]  %s3, 2048, %s45, [#allocation6], 128, 128, 8
    $region17: #{tpu_custom_call.1} parent=1 // pred_fallthru
      _
    // Predicated region
    $region18: #{tpu_custom_call.1} parent=1 // pred_check
      _
    $region19: #{tpu_custom_call.1} parent=1 // pred_check_branch
      %52 = sbr.rel (0) target = $region21
    $region20: #{tpu_custom_call.1} parent=1 // pred_region
      _
    $region21: #{tpu_custom_call.1} parent=1 // pred_fallthru
      _
    // Predicated region
    $region22: #{tpu_custom_call.1} parent=1 // pred_check
      _
    $region23: #{tpu_custom_call.1} parent=1 // pred_check_branch
      %54 = sbr.rel (0) target = $region25
    $region24: #{tpu_custom_call.1} parent=1 // pred_region
      %55 = dma.done [#allocation3], 256
    $region25: #{tpu_custom_call.1} parent=1 // pred_fallthru
      _
    // Predicated region
    $region26: #{tpu_custom_call.1} parent=1 // pred_check
      _
    $region27: #{tpu_custom_call.1} parent=1 // pred_check_branch
      %57 = sbr.rel (0) target = $region29
    $region28: #{tpu_custom_call.1} parent=1 // pred_region
      %58 = dma.done [#allocation6], 2048
    $region29: #{tpu_custom_call.1} parent=1 // pred_fallthru
      _
    // Predicated region
    $region30: #{tpu_custom_call.1} parent=1 // pred_check
      _
    $region31: #{tpu_custom_call.1} parent=1 // pred_check_branch
      %60 = sbr.rel (0) target = $region33
    $region32: #{tpu_custom_call.1} parent=1 // pred_region
      %61 = dma.done [#allocation6], 2048
    $region33: #{tpu_custom_call.1} parent=1 // pred_fallthru
      _
    %v62 = vld [vmem:[#allocation2] sm:$0xff]
    %v63 = vld [vmem:[#allocation2 + $0x8] sm:$0xff]
    %v64 = vld [vmem:[#allocation5] sm:$0xff]
    %v65 = vld [vmem:[#allocation5 + $0x8] sm:$0xff]
    %v66 = vld [vmem:[#allocation5 + $0x10] sm:$0xff]
    %v67 = vld [vmem:[#allocation5 + $0x18] sm:$0xff]
    %v68 = vld [vmem:[#allocation5 + $0x20] sm:$0xff]
    %v69 = vld [vmem:[#allocation5 + $0x28] sm:$0xff]
    %v70 = vld [vmem:[#allocation5 + $0x30] sm:$0xff]
    %v71 = vld [vmem:[#allocation5 + $0x38] sm:$0xff]
    %v72 = vld [vmem:[#allocation5 + $0x40] sm:$0xff]
    %v73 = vld [vmem:[#allocation5 + $0x48] sm:$0xff]
    %v74 = vld [vmem:[#allocation5 + $0x50] sm:$0xff]
    %v75 = vld [vmem:[#allocation5 + $0x58] sm:$0xff]
    %v76 = vld [vmem:[#allocation5 + $0x60] sm:$0xff]
    %v77 = vld [vmem:[#allocation5 + $0x68] sm:$0xff]
    %v78 = vld [vmem:[#allocation5 + $0x70] sm:$0xff]
    %v79 = vld [vmem:[#allocation5 + $0x78] sm:$0xff]
    %v80 = vld [vmem:[%s2] sm:$0x1]
    %v82 = vlaneseq
    %v83 = vshrl.u32 %v82, 7
    %v84 = vsub.s32 0, %v83
    %v85 = vrot.slane %v80, %v84
    %87 = vmatprep.subr.mxu0 0.0
    %88 = vmatpush1.msra.mxu0 %v79
    %89 = vmatprep.subr.mxu0 0.0
    %90 = vmatpush1.msra.mxu0 %v78
    %91 = vmatprep.subr.mxu0 0.0
    %92 = vmatpush1.msra.mxu0 %v77
    %93 = vmatprep.subr.mxu0 0.0
    %94 = vmatpush1.msra.mxu0 %v76
    %95 = vmatprep.subr.mxu0 0.0
    %96 = vmatpush1.msra.mxu0 %v75
    %97 = vmatprep.subr.mxu0 0.0
    %98 = vmatpush1.msra.mxu0 %v74
    %99 = vmatprep.subr.mxu0 0.0
    %100 = vmatpush1.msra.mxu0 %v73
    %101 = vmatprep.subr.mxu0 0.0
    %102 = vmatpush1.msra.mxu0 %v72
    %103 = vmatprep.subr.mxu0 0.0
    %104 = vmatpush1.msra.mxu0 %v71
    %105 = vmatprep.subr.mxu0 0.0
    %106 = vmatpush1.msra.mxu0 %v70
    %107 = vmatprep.subr.mxu0 0.0
    %108 = vmatpush1.msra.mxu0 %v69
    %109 = vmatprep.subr.mxu0 0.0
    %110 = vmatpush1.msra.mxu0 %v68
    %111 = vmatprep.subr.mxu0 0.0
    %112 = vmatpush1.msra.mxu0 %v67
    %113 = vmatprep.subr.mxu0 0.0
    %114 = vmatpush1.msra.mxu0 %v66
    %115 = vmatprep.subr.mxu0 0.0
    %116 = vmatpush1.msra.mxu0 %v65
    %117 = vmatprep.subr.mxu0 0.0
    %118 = vmatpush1.msra.mxu0 %v64
    %119 = vmatprep.subr.mxu0 0.0
    %120 = vmatpush2.msra.mxu0 0.0
    %121 = vmatprep.subr.mxu0 0.0
    %122 = vmatpush2.msra.mxu0 0.0
    %123 = vmatprep.subr.mxu0 0.0
    %124 = vmatpush2.msra.mxu0 0.0
    %125 = vmatprep.subr.mxu0 0.0
    %126 = vmatpush2.msra.mxu0 0.0
    %127 = vmatprep.subr.mxu0 0.0
    %128 = vmatpush2.msra.mxu0 0.0
    %129 = vmatprep.subr.mxu0 0.0
    %130 = vmatpush2.msra.mxu0 0.0
    %131 = vmatprep.subr.mxu0 0.0
    %132 = vmatpush2.msra.mxu0 0.0
    %133 = vmatprep.subr.mxu0 0.0
    %134 = vmatpush2.msra.mxu0 0.0
    %135 = vmatprep.subr.mxu0 0.0
    %136 = vmatpush2.msra.mxu0 0.0
    %137 = vmatprep.subr.mxu0 0.0
    %138 = vmatpush2.msra.mxu0 0.0
    %139 = vmatprep.subr.mxu0 0.0
    %140 = vmatpush2.msra.mxu0 0.0
    %141 = vmatprep.subr.mxu0 0.0
    %142 = vmatpush2.msra.mxu0 0.0
    %143 = vmatprep.subr.mxu0 0.0
    %144 = vmatpush2.msra.mxu0 0.0
    %145 = vmatprep.subr.mxu0 0.0
    %146 = vmatpush2.msra.mxu0 0.0
    %147 = vmatprep.subr.mxu0 0.0
    %148 = vmatpush2.msra.mxu0 0.0
    %149 = vmatprep.subr.mxu0 0.0
    %150 = vmatpush2.msra.mxu0 0.0
    %151 = vmatprep.mubr.f32.mxu0 0.0
    %152 = vmatmul.mubr.f32.gmra.mxu0 %v62
    %v153 = vpop.f32.mrf.mxu0
    %v154 = vadd.f32 %v85, %v153
    %v155 = vpop.f32.mrf.mxu0
    %156 = vmatprep.mubr.f32.mxu0 0.0
    %157 = vmatmul.mubr.f32.gmra.mxu0 %v63
    %v158 = vpop.f32.mrf.mxu0
    %v159 = vadd.f32 %v85, %v158
    %v160 = vpop.f32.mrf.mxu0
    %161 = vdwg.mxu0
    %v162 = vmax.f32 %v154, 0.0
    %v163 = vmax.f32 %v159, 0.0
    %v164 = vld [vmem:[#allocation7] sm:$0xff]
    %v165 = vld [vmem:[#allocation7 + $0x8] sm:$0xff]
    %v166 = vld [vmem:[#allocation7 + $0x10] sm:$0xff]
    %v167 = vld [vmem:[#allocation7 + $0x18] sm:$0xff]
    %v168 = vld [vmem:[#allocation7 + $0x20] sm:$0xff]
    %v169 = vld [vmem:[#allocation7 + $0x28] sm:$0xff]
    %v170 = vld [vmem:[#allocation7 + $0x30] sm:$0xff]
    %v171 = vld [vmem:[#allocation7 + $0x38] sm:$0xff]
    %v172 = vld [vmem:[#allocation7 + $0x40] sm:$0xff]
    %v173 = vld [vmem:[#allocation7 + $0x48] sm:$0xff]
    %v174 = vld [vmem:[#allocation7 + $0x50] sm:$0xff]
    %v175 = vld [vmem:[#allocation7 + $0x58] sm:$0xff]
    %v176 = vld [vmem:[#allocation7 + $0x60] sm:$0xff]
    %v177 = vld [vmem:[#allocation7 + $0x68] sm:$0xff]
    %v178 = vld [vmem:[#allocation7 + $0x70] sm:$0xff]
    %v179 = vld [vmem:[#allocation7 + $0x78] sm:$0xff]
    %v180 = vld [vmem:[%s4] sm:$0x1]
    %v182 = vlaneseq
    %v183 = vshrl.u32 %v182, 7
    %v184 = vsub.s32 0, %v183
    %v185 = vrot.slane %v180, %v184
    %187 = vmatprep.subr.mxu0 0.0
    %188 = vmatpush1.msra.mxu0 %v179
    %189 = vmatprep.subr.mxu0 0.0
    %190 = vmatpush1.msra.mxu0 %v178
    %191 = vmatprep.subr.mxu0 0.0
    %192 = vmatpush1.msra.mxu0 %v177
    %193 = vmatprep.subr.mxu0 0.0
    %194 = vmatpush1.msra.mxu0 %v176
    %195 = vmatprep.subr.mxu0 0.0
    %196 = vmatpush1.msra.mxu0 %v175
    %197 = vmatprep.subr.mxu0 0.0
    %198 = vmatpush1.msra.mxu0 %v174
    %199 = vmatprep.subr.mxu0 0.0
    %200 = vmatpush1.msra.mxu0 %v173
    %201 = vmatprep.subr.mxu0 0.0
    %202 = vmatpush1.msra.mxu0 %v172
    %203 = vmatprep.subr.mxu0 0.0
    %204 = vmatpush1.msra.mxu0 %v171
    %205 = vmatprep.subr.mxu0 0.0
    %206 = vmatpush1.msra.mxu0 %v170
    %207 = vmatprep.subr.mxu0 0.0
    %208 = vmatpush1.msra.mxu0 %v169
    %209 = vmatprep.subr.mxu0 0.0
    %210 = vmatpush1.msra.mxu0 %v168
    %211 = vmatprep.subr.mxu0 0.0
    %212 = vmatpush1.msra.mxu0 %v167
    %213 = vmatprep.subr.mxu0 0.0
    %214 = vmatpush1.msra.mxu0 %v166
    %215 = vmatprep.subr.mxu0 0.0
    %216 = vmatpush1.msra.mxu0 %v165
    %217 = vmatprep.subr.mxu0 0.0
    %218 = vmatpush1.msra.mxu0 %v164
    %219 = vmatprep.subr.mxu0 0.0
    %220 = vmatpush2.msra.mxu0 0.0
    %221 = vmatprep.subr.mxu0 0.0
    %222 = vmatpush2.msra.mxu0 0.0
    %223 = vmatprep.subr.mxu0 0.0
    %224 = vmatpush2.msra.mxu0 0.0
    %225 = vmatprep.subr.mxu0 0.0
    %226 = vmatpush2.msra.mxu0 0.0
    %227 = vmatprep.subr.mxu0 0.0
    %228 = vmatpush2.msra.mxu0 0.0
    %229 = vmatprep.subr.mxu0 0.0
    %230 = vmatpush2.msra.mxu0 0.0
    %231 = vmatprep.subr.mxu0 0.0
    %232 = vmatpush2.msra.mxu0 0.0
    %233 = vmatprep.subr.mxu0 0.0
    %234 = vmatpush2.msra.mxu0 0.0
    %235 = vmatprep.subr.mxu0 0.0
    %236 = vmatpush2.msra.mxu0 0.0
    %237 = vmatprep.subr.mxu0 0.0
    %238 = vmatpush2.msra.mxu0 0.0
    %239 = vmatprep.subr.mxu0 0.0
    %240 = vmatpush2.msra.mxu0 0.0
    %241 = vmatprep.subr.mxu0 0.0
    %242 = vmatpush2.msra.mxu0 0.0
    %243 = vmatprep.subr.mxu0 0.0
    %244 = vmatpush2.msra.mxu0 0.0
    %245 = vmatprep.subr.mxu0 0.0
    %246 = vmatpush2.msra.mxu0 0.0
    %247 = vmatprep.subr.mxu0 0.0
    %248 = vmatpush2.msra.mxu0 0.0
    %249 = vmatprep.subr.mxu0 0.0
    %250 = vmatpush2.msra.mxu0 0.0
    %251 = vmatprep.mubr.f32.mxu0 0.0
    %252 = vmatmul.mubr.f32.gmra.mxu0 %v162
    %v253 = vpop.f32.mrf.mxu0
    %v254 = vadd.f32 %v185, %v253
    %v255 = vpop.f32.mrf.mxu0
    %256 = vmatprep.mubr.f32.mxu0 0.0
    %257 = vmatmul.mubr.f32.gmra.mxu0 %v163
    %v258 = vpop.f32.mrf.mxu0
    %v259 = vadd.f32 %v185, %v258
    %v260 = vpop.f32.mrf.mxu0
    %261 = vdwg.mxu0
    %262 = vst [vmem:[#allocation8] sm:$0xff] %v254
    %263 = vst [vmem:[#allocation8 + $0x8] sm:$0xff] %v259
    // Predicated region
    $region34: #{tpu_custom_call.1} parent=1 // pred_check
      _
    $region35: #{tpu_custom_call.1} parent=1 // pred_check_branch
      %265 = sbr.rel (0) target = $region37
    $region36: #{tpu_custom_call.1} parent=1 // pred_region
      %s267 = ssub.s32 256, 256
      %268 = vsyncadd [#allocation4], %s267
      %s269 = sshll.u32 [#allocation8], 4
      %s270 = int_to_ptr.vmem [resolvable:$true] %s269
      %275 = dma.vmem_to_hbm [thread:$0]  %s270, 256, %s5, [#allocation4], 128, 128, 8
    $region37: #{tpu_custom_call.1} parent=1 // pred_fallthru
      _
    // Predicated region
    $region38: #{tpu_custom_call.1} parent=1 // pred_check
      _
    $region39: #{tpu_custom_call.1} parent=1 // pred_check_branch
      %277 = sbr.rel (0) target = $region41
    $region40: #{tpu_custom_call.1} parent=1 // pred_region
      %278 = dma.done [#allocation4], 256
    $region41: #{tpu_custom_call.1} parent=1 // pred_fallthru
      _
    %279 = vsyncpa [#allocation3], 1
    %280 = vsyncpa [#allocation6], 1
    %281 = vsyncpa [#allocation4], 1

</llo_original>
